<compile_context>
chip_gen: v6e
topology: v6e:2x2x1
jax: 0.10.0
libtpu: 0.0.40
codegen_flags: <defaults>
</compile_context>

<pallas_src>
import functools

import jax
import jax.numpy as jnp
from jax.experimental import pallas as pl
from jax.experimental.pallas import tpu as pltpu

_LANE = 128
_SUBLANE = 8


def _round_up(x, m):
    return (x + m - 1) // m * m


def _mlp_fused_kernel(*refs, num_hidden, activation):
    """refs = (x, w0, b0, ..., w_{H-1}, b_{H-1}, w_out_row, b_out, o)."""
    x_ref = refs[0]
    o_ref = refs[-1]
    params = refs[1:-1]

    h = x_ref[...]  # (TB, Din_p) bf16
    for i in range(num_hidden):
        w = params[2 * i][...]        # (Dprev_p, Dh_p) bf16 (MXU feed)
        b = params[2 * i + 1][...]    # (1, Dh_p) f32
        y = jnp.dot(h.astype(jnp.bfloat16), w,
                    preferred_element_type=jnp.float32) + b
        if activation == "relu":
            h = jnp.maximum(y, 0.0)
        else:  # sigmoid -> EUP
            h = jax.nn.sigmoid(y)

    # Final Linear(prev, 1): VPU multiply + cross-lane reduce, no MXU pass.
    w_out = params[-2][...]  # (1, Dlast_p) f32 row vector
    b_out = params[-1][...]  # (1, 1) f32
    y = jnp.sum(h.astype(jnp.float32) * w_out, axis=-1, keepdims=True) + b_out
    o_ref[...] = y.astype(o_ref.dtype)


def init_mlp_params(key, input_size, layer_sizes):
    """Mimic nn.Linear's U(-1/sqrt(in), 1/sqrt(in)) init.

    Weights are stored as (in, out) (transposed vs. PyTorch's (out, in)), so
    each layer computes y = x @ W + b, matching y = x @ weight.T + bias.
    """
    params = []
    prev = input_size
    dims = list(layer_sizes) + [1]  # final Linear(prev, 1)
    for size in dims:
        key, kw, kb = jax.random.split(key, 3)
        bound = 1.0 / jnp.sqrt(jnp.asarray(prev, jnp.float32))
        w = jax.random.uniform(kw, (prev, size), jnp.float32, -bound, bound)
        b = jax.random.uniform(kb, (size,), jnp.float32, -bound, bound)
        params.append((w, b))
        prev = size
    return params


@functools.partial(jax.jit, static_argnames=("activation_function",))
def mlp_forward(params, x, activation_function="ReLU"):
    """Fused Pallas forward pass. params: [(W_in_out, b), ...], x: (B, Din)."""
    if activation_function == "ReLU":
        act = "relu"
    elif activation_function == "Sigmoid":
        act = "sigmoid"
    else:
        raise ValueError("Activation function must be 'ReLU' or 'Sigmoid'.")

    B, Din = x.shape
    out_dtype = x.dtype
    num_hidden = len(params) - 1

    # ---- one-time padding / packing: lane-dense (multiples of 128) ----
    din_p = _round_up(Din, _LANE)
    x_p = jnp.pad(x, ((0, 0), (0, din_p - Din))).astype(jnp.bfloat16)

    flat_inputs = []
    in_specs = []
    prev_p = din_p
    for (w, b) in params[:-1]:
        d_in, d_out = w.shape
        dout_p = _round_up(d_out, _LANE)
        w_p = jnp.pad(w, ((0, prev_p - d_in), (0, dout_p - d_out))).astype(
            jnp.bfloat16)
        b_p = jnp.pad(b, (0, dout_p - d_out)).reshape(1, dout_p).astype(
            jnp.float32)
        flat_inputs += [w_p, b_p]
        in_specs += [
            pl.BlockSpec((prev_p, dout_p), lambda i: (0, 0)),  # VMEM resident
            pl.BlockSpec((1, dout_p), lambda i: (0, 0)),
        ]
        prev_p = dout_p

    w_out, b_out = params[-1]           # (Dlast, 1), (1,)
    d_last = w_out.shape[0]
    w_out_row = jnp.pad(w_out.reshape(1, d_last),
                        ((0, 0), (0, prev_p - d_last))).astype(jnp.float32)
    b_out_2d = b_out.reshape(1, 1).astype(jnp.float32)
    flat_inputs += [w_out_row, b_out_2d]
    in_specs += [
        pl.BlockSpec((1, prev_p), lambda i: (0, 0)),
        pl.BlockSpec((1, 1), lambda i: (0, 0)),
    ]

    # ---- batch tiling (parallel grid axis; weights stay in VMEM) ----
    TB = 512 if B >= 512 else _round_up(B, _SUBLANE)
    num_tiles = pl.cdiv(B, TB)
    b_p_rows = num_tiles * TB
    if b_p_rows != B:
        x_p = jnp.pad(x_p, ((0, b_p_rows - B), (0, 0)))

    kernel = functools.partial(
        _mlp_fused_kernel, num_hidden=num_hidden, activation=act)

    out = pl.pallas_call(
        kernel,
        out_shape=jax.ShapeDtypeStruct((b_p_rows, 1), out_dtype),
        grid=(num_tiles,),
        in_specs=[pl.BlockSpec((TB, din_p), lambda i: (i, 0))] + in_specs,
        out_specs=pl.BlockSpec((TB, 1), lambda i: (i, 0)),
        compiler_params=pltpu.CompilerParams(
            dimension_semantics=("parallel",),
        ),
    )(x_p, *flat_inputs)
    return out[:B]


def mlp_reference_bf16(params, x, activation_function="ReLU"):
    """Pure-JAX reference mirroring the kernel's numerics (bf16 MXU, f32 acc)."""
    act = jax.nn.relu if activation_function == "ReLU" else jax.nn.sigmoid
    h = x.astype(jnp.bfloat16)
    for w, b in params[:-1]:
        y = jnp.dot(h.astype(jnp.bfloat16), w.astype(jnp.bfloat16),
                    preferred_element_type=jnp.float32) + b
        h = act(y)
    w, b = params[-1]
    return jnp.sum(h.astype(jnp.float32) * w.reshape(1, -1),
                   axis=-1, keepdims=True) + b


def mlp_reference_f32(params, x, activation_function="ReLU"):
    """Full-f32 reference (original PyTorch semantics)."""
    act = jax.nn.relu if activation_function == "ReLU" else jax.nn.sigmoid
    for w, b in params[:-1]:
        x = act(x @ w + b)
    w, b = params[-1]
    return x @ w + b


if __name__ == "__main__":
    key = jax.random.PRNGKey(0)

    batch = 8
    input_size = 32
    layer_sizes = [64, 32]

    kp, kx = jax.random.split(key)
    params = init_mlp_params(kp, input_size, layer_sizes)
    x = jax.random.normal(kx, (batch, input_size), jnp.float32)

    ok = True
    for act_fn in ("ReLU", "Sigmoid"):
        out = mlp_forward(params, x, activation_function=act_fn)
        out = jax.block_until_ready(out)
        assert out.shape == (batch, 1), out.shape

        ref_bf16 = mlp_reference_bf16(params, x, act_fn)
        ref_f32 = mlp_reference_f32(params, x, act_fn)
        # Tight check vs. identical-numerics reference.
        ok &= bool(jnp.allclose(out, ref_bf16, atol=2e-3, rtol=2e-3))
        # Loose check vs. full-f32 PyTorch-equivalent semantics (bf16 MXU feed).
        ok &= bool(jnp.allclose(out, ref_f32, atol=1e-1, rtol=5e-2))

    assert ok
    print("KERNEL_OK")
</pallas_src>

<mosaic_0001>
module attributes {stable_mosaic.version = 11 : i64} {
  func.func @_mlp_fused_kernel(%arg0: i32, %arg1: memref<8x128xbf16, #tpu.memory_space<vmem>>, %arg2: memref<128x128xbf16, #tpu.memory_space<vmem>>, %arg3: memref<1x128xf32, #tpu.memory_space<vmem>>, %arg4: memref<128x128xbf16, #tpu.memory_space<vmem>>, %arg5: memref<1x128xf32, #tpu.memory_space<vmem>>, %arg6: memref<1x128xf32, #tpu.memory_space<vmem>>, %arg7: memref<1x1xf32, #tpu.memory_space<vmem>>, %arg8: memref<8x1xf32, #tpu.memory_space<vmem>>) attributes {dimension_semantics = [#tpu.dimension_semantics<parallel>], iteration_bounds = array<i64: 1>, scalar_prefetch = 0 : i64, scratch_operands = 0 : i64, tpu.core_type = #tpu.core_type<tc>, window_params = [{transform_indices = @transform_0, window_bounds = array<i64: 8, 128>}, {pipeline_mode = #tpu.pipeline_mode<synchronous>, transform_indices = @transform_1, window_bounds = array<i64: 128, 128>}, {pipeline_mode = #tpu.pipeline_mode<synchronous>, transform_indices = @transform_2, window_bounds = array<i64: 1, 128>}, {pipeline_mode = #tpu.pipeline_mode<synchronous>, transform_indices = @transform_3, window_bounds = array<i64: 128, 128>}, {pipeline_mode = #tpu.pipeline_mode<synchronous>, transform_indices = @transform_4, window_bounds = array<i64: 1, 128>}, {pipeline_mode = #tpu.pipeline_mode<synchronous>, transform_indices = @transform_5, window_bounds = array<i64: 1, 128>}, {pipeline_mode = #tpu.pipeline_mode<synchronous>, transform_indices = @transform_6, window_bounds = array<i64: 1, 1>}, {transform_indices = @transform_7, window_bounds = array<i64: 8, 1>}]} {
    %c0 = arith.constant 0 : index
    %c0_0 = arith.constant 0 : index
    %0 = vector.load %arg1[%c0, %c0_0] : memref<8x128xbf16, #tpu.memory_space<vmem>>, vector<8x128xbf16>
    %c0_1 = arith.constant 0 : index
    %c0_2 = arith.constant 0 : index
    %1 = vector.load %arg2[%c0_1, %c0_2] : memref<128x128xbf16, #tpu.memory_space<vmem>>, vector<128x128xbf16>
    %c0_3 = arith.constant 0 : index
    %c0_4 = arith.constant 0 : index
    %2 = vector.load %arg3[%c0_3, %c0_4] : memref<1x128xf32, #tpu.memory_space<vmem>>, vector<1x128xf32>
    %cst = arith.constant dense<0.000000e+00> : vector<8x128xf32>
    %3 = tpu.matmul %0, %1, %cst {dimension_numbers = #tpu.dot_dimension_numbers<[1], [0], [0], [1], [0, 0, 1, 1], [], []>} : vector<8x128xbf16>, vector<128x128xbf16>, vector<8x128xf32> -> vector<8x128xf32>
    %4 = vector.broadcast %2 : vector<1x128xf32> to vector<8x128xf32>
    %5 = arith.addf %3, %4 : vector<8x128xf32>
    %cst_5 = arith.constant 0.000000e+00 : f32
    %6 = vector.broadcast %cst_5 : f32 to vector<8x128xf32>
    %7 = arith.maximumf %5, %6 : vector<8x128xf32>
    %c0_6 = arith.constant 0 : index
    %c0_7 = arith.constant 0 : index
    %8 = vector.load %arg4[%c0_6, %c0_7] : memref<128x128xbf16, #tpu.memory_space<vmem>>, vector<128x128xbf16>
    %c0_8 = arith.constant 0 : index
    %c0_9 = arith.constant 0 : index
    %9 = vector.load %arg5[%c0_8, %c0_9] : memref<1x128xf32, #tpu.memory_space<vmem>>, vector<1x128xf32>
    %10 = arith.truncf %7 : vector<8x128xf32> to vector<8x128xbf16>
    %cst_10 = arith.constant dense<0.000000e+00> : vector<8x128xf32>
    %11 = tpu.matmul %10, %8, %cst_10 {dimension_numbers = #tpu.dot_dimension_numbers<[1], [0], [0], [1], [0, 0, 1, 1], [], []>} : vector<8x128xbf16>, vector<128x128xbf16>, vector<8x128xf32> -> vector<8x128xf32>
    %12 = vector.broadcast %9 : vector<1x128xf32> to vector<8x128xf32>
    %13 = arith.addf %11, %12 : vector<8x128xf32>
    %cst_11 = arith.constant 0.000000e+00 : f32
    %14 = vector.broadcast %cst_11 : f32 to vector<8x128xf32>
    %15 = arith.maximumf %13, %14 : vector<8x128xf32>
    %c0_12 = arith.constant 0 : index
    %c0_13 = arith.constant 0 : index
    %16 = vector.load %arg6[%c0_12, %c0_13] : memref<1x128xf32, #tpu.memory_space<vmem>>, vector<1x128xf32>
    %c0_14 = arith.constant 0 : index
    %c0_15 = arith.constant 0 : index
    %17 = vector.load %arg7[%c0_14, %c0_15] : memref<1x1xf32, #tpu.memory_space<vmem>>, vector<1x1xf32>
    %18 = vector.broadcast %16 : vector<1x128xf32> to vector<8x128xf32>
    %19 = arith.mulf %15, %18 : vector<8x128xf32>
    %cst_16 = arith.constant dense<0.000000e+00> : vector<8xf32>
    %20 = vector.multi_reduction <add>, %19, %cst_16 [1] : vector<8x128xf32> to vector<8xf32>
    %21 = vector.shape_cast %20 : vector<8xf32> to vector<8x1xf32>
    %22 = vector.broadcast %17 : vector<1x1xf32> to vector<8x1xf32>
    %23 = arith.addf %21, %22 : vector<8x1xf32>
    %c0_17 = arith.constant 0 : index
    %c0_18 = arith.constant 0 : index
    %24 = vector.load %arg8[%c0_17, %c0_18] : memref<8x1xf32, #tpu.memory_space<vmem>>, vector<8x1xf32>
    tpu.vector_store %arg8[%c0_17, %c0_18], %23 {strides = array<i32>} : memref<8x1xf32, #tpu.memory_space<vmem>>, vector<8x1xf32>,
    return
  }
  func.func @transform_0(%arg0: i32) -> (i32, i32) {
    %c0_i32 = arith.constant 0 : i32
    %c0_i32_0 = arith.constant 0 : i32
    return %arg0, %c0_i32 : i32, i32
  }
  func.func @transform_1(%arg0: i32) -> (i32, i32) {
    %c0_i32 = arith.constant 0 : i32
    %c0_i32_0 = arith.constant 0 : i32
    %c0_i32_1 = arith.constant 0 : i32
    return %c0_i32, %c0_i32_0 : i32, i32
  }
  func.func @transform_2(%arg0: i32) -> (i32, i32) {
    %c0_i32 = arith.constant 0 : i32
    %c0_i32_0 = arith.constant 0 : i32
    %c0_i32_1 = arith.constant 0 : i32
    return %c0_i32, %c0_i32_0 : i32, i32
  }
  func.func @transform_3(%arg0: i32) -> (i32, i32) {
    %c0_i32 = arith.constant 0 : i32
    %c0_i32_0 = arith.constant 0 : i32
    %c0_i32_1 = arith.constant 0 : i32
    return %c0_i32, %c0_i32_0 : i32, i32
  }
  func.func @transform_4(%arg0: i32) -> (i32, i32) {
    %c0_i32 = arith.constant 0 : i32
    %c0_i32_0 = arith.constant 0 : i32
    %c0_i32_1 = arith.constant 0 : i32
    return %c0_i32, %c0_i32_0 : i32, i32
  }
  func.func @transform_5(%arg0: i32) -> (i32, i32) {
    %c0_i32 = arith.constant 0 : i32
    %c0_i32_0 = arith.constant 0 : i32
    %c0_i32_1 = arith.constant 0 : i32
    return %c0_i32, %c0_i32_0 : i32, i32
  }
  func.func @transform_6(%arg0: i32) -> (i32, i32) {
    %c0_i32 = arith.constant 0 : i32
    %c0_i32_0 = arith.constant 0 : i32
    %c0_i32_1 = arith.constant 0 : i32
    return %c0_i32, %c0_i32_0 : i32, i32
  }
  func.func @transform_7(%arg0: i32) -> (i32, i32) {
    %c0_i32 = arith.constant 0 : i32
    %c0_i32_0 = arith.constant 0 : i32
    return %arg0, %c0_i32 : i32, i32
  }
}

</mosaic_0001>

<llo_original>
// kernel: mlp_forward.1
$region0: #{mlp_forward.1}
  #allocation0 [shape = 'u32[]', space=smem, size = 0x4, offset = 0x4, fixed_abs, tag = 'smem constant byte address 0x4 - core index']
  #allocation1 [shape = 'u32[144,128]{1,0:T(1,128)}', space=vmem, size = 0x12000, scoped, tag = 'internal scratch']
  #allocation2 [shape = 'f32[1,1]{1,0:T(1,128)S(1)}', space=vmem, size = 0x200, scoped, tag = 'scoped memory for mlp_forward.1']
  %s0 = inlined_call_operand.vmem [shape: bf16[8,128], index: 0, kind: input, shape index: {}]
  %s1 = inlined_call_operand.vmem [shape: bf16[128,128], index: 1, kind: input, shape index: {}]
  %s2 = inlined_call_operand.vmem [shape: f32[1,128], index: 2, kind: input, shape index: {}]
  %s3 = inlined_call_operand.vmem [shape: bf16[128,128], index: 3, kind: input, shape index: {}]
  %s4 = inlined_call_operand.vmem [shape: f32[1,128], index: 4, kind: input, shape index: {}]
  %s5 = inlined_call_operand.vmem [shape: f32[1,128], index: 5, kind: input, shape index: {}]
  %s6 = inlined_call_operand.<no memory space> [shape: f32[1,1], index: 6, kind: input, shape index: {}]
  %s7 = inlined_call_operand.vmem [shape: f32[8,1], index: 7, kind: output, shape index: {}]
  %s8 = sld [smem:[#allocation0]]
  $region38: #{mlp_forward.1} parent=0
    _
  %s10 = ssub.s32 1, %s8
  %s11 = scalar_select 0, %s10, %s8
  %v12 = vstv %s6
  %13 = vst [vmem:[#allocation2] sm:$0x1] %v12
  // Predicated region
  $region2: #{mlp_forward.1} parent=0 // pred_check
    _
  $region3: #{mlp_forward.1} parent=0 // pred_check_branch
    %15 = sbr.rel (0) target = $region5
  $region4: #{mlp_forward.1} parent=0 // pred_region
    _
  $region5: #{mlp_forward.1} parent=0 // pred_fallthru
    _
  // Predicated region
  $region6: #{mlp_forward.1} parent=0 // pred_check
    _
  $region7: #{mlp_forward.1} parent=0 // pred_check_branch
    %17 = sbr.rel (0) target = $region9
  $region8: #{mlp_forward.1} parent=0 // pred_region
    _
  $region9: #{mlp_forward.1} parent=0 // pred_fallthru
    _
  // Predicated region
  $region10: #{mlp_forward.1} parent=0 // pred_check
    _
  $region11: #{mlp_forward.1} parent=0 // pred_check_branch
    %19 = sbr.rel (0) target = $region13
  $region12: #{mlp_forward.1} parent=0 // pred_region
    _
  $region13: #{mlp_forward.1} parent=0 // pred_fallthru
    _
  // Predicated region
  $region14: #{mlp_forward.1} parent=0 // pred_check
    _
  $region15: #{mlp_forward.1} parent=0 // pred_check_branch
    %21 = sbr.rel (0) target = $region17
  $region16: #{mlp_forward.1} parent=0 // pred_region
    _
  $region17: #{mlp_forward.1} parent=0 // pred_fallthru
    _
  // Predicated region
  $region18: #{mlp_forward.1} parent=0 // pred_check
    _
  $region19: #{mlp_forward.1} parent=0 // pred_check_branch
    %23 = sbr.rel (0) target = $region21
  $region20: #{mlp_forward.1} parent=0 // pred_region
    _
  $region21: #{mlp_forward.1} parent=0 // pred_fallthru
    _
  // Predicated region
  $region22: #{mlp_forward.1} parent=0 // pred_check
    _
  $region23: #{mlp_forward.1} parent=0 // pred_check_branch
    %25 = sbr.rel (0) target = $region25
  $region24: #{mlp_forward.1} parent=0 // pred_region
    _
  $region25: #{mlp_forward.1} parent=0 // pred_fallthru
    _
  // Predicated region
  $region26: #{mlp_forward.1} parent=0 // pred_check
    _
  $region27: #{mlp_forward.1} parent=0 // pred_check_branch
    %27 = sbr.rel (0) target = $region29
  $region28: #{mlp_forward.1} parent=0 // pred_region
    _
  $region29: #{mlp_forward.1} parent=0 // pred_fallthru
    _
  %v29 = vld [vmem:[%s0] sm:$0xf]
  %v30 = vld [vmem:[%s1] sm:$0xf]
  %v31 = vld [vmem:[%s1 + $0x4] sm:$0xf]
  %v32 = vld [vmem:[%s1 + $0x8] sm:$0xf]
  %v33 = vld [vmem:[%s1 + $0xc] sm:$0xf]
  %v34 = vld [vmem:[%s1 + $0x10] sm:$0xf]
  %v35 = vld [vmem:[%s1 + $0x14] sm:$0xf]
  %v36 = vld [vmem:[%s1 + $0x18] sm:$0xf]
  %v37 = vld [vmem:[%s1 + $0x1c] sm:$0xf]
  %v38 = vld [vmem:[%s1 + $0x20] sm:$0xf]
  %v39 = vld [vmem:[%s1 + $0x24] sm:$0xf]
  %v40 = vld [vmem:[%s1 + $0x28] sm:$0xf]
  %v41 = vld [vmem:[%s1 + $0x2c] sm:$0xf]
  %v42 = vld [vmem:[%s1 + $0x30] sm:$0xf]
  %v43 = vld [vmem:[%s1 + $0x34] sm:$0xf]
  %v44 = vld [vmem:[%s1 + $0x38] sm:$0xf]
  %v45 = vld [vmem:[%s1 + $0x3c] sm:$0xf]
  %v46 = vld [vmem:[%s2] sm:$0x1]
  %v48 = vlaneseq
  %v49 = vshrl.u32 %v48, 7
  %v50 = vsub.s32 0, %v49
  %v51 = vrot.slane %v46, %v50
  %v69 = vunpack.c.l.b16 %v30
  %v70 = vunpack.c.l.b16 %v31
  %v71 = vunpack.c.l.b16 %v32
  %v72 = vunpack.c.l.b16 %v33
  %v73 = vunpack.c.l.b16 %v34
  %v74 = vunpack.c.l.b16 %v35
  %v75 = vunpack.c.l.b16 %v36
  %v76 = vunpack.c.l.b16 %v37
  %v77 = vunpack.c.l.b16 %v38
  %v78 = vunpack.c.l.b16 %v39
  %v79 = vunpack.c.l.b16 %v40
  %v80 = vunpack.c.l.b16 %v41
  %v81 = vunpack.c.l.b16 %v42
  %v82 = vunpack.c.l.b16 %v43
  %v83 = vunpack.c.l.b16 %v44
  %v84 = vunpack.c.l.b16 %v45
  %v85 = vpack.c.b16 %v70, %v69
  %v86 = vpack.c.b16 %v72, %v71
  %v87 = vpack.c.b16 %v74, %v73
  %v88 = vpack.c.b16 %v76, %v75
  %v89 = vpack.c.b16 %v78, %v77
  %v90 = vpack.c.b16 %v80, %v79
  %v91 = vpack.c.b16 %v82, %v81
  %v92 = vpack.c.b16 %v84, %v83
  %101 = vmatprep.subr.bf16.mxu0 0
  %102 = vmatpush1.bf16.msra.mxu0 %v92
  %103 = vmatprep.subr.bf16.mxu0 0
  %104 = vmatpush1.bf16.msra.mxu0 %v91
  %105 = vmatprep.subr.bf16.mxu0 0
  %106 = vmatpush1.bf16.msra.mxu0 %v90
  %107 = vmatprep.subr.bf16.mxu0 0
  %108 = vmatpush1.bf16.msra.mxu0 %v89
  %109 = vmatprep.subr.bf16.mxu0 0
  %110 = vmatpush1.bf16.msra.mxu0 %v88
  %111 = vmatprep.subr.bf16.mxu0 0
  %112 = vmatpush1.bf16.msra.mxu0 %v87
  %113 = vmatprep.subr.bf16.mxu0 0
  %114 = vmatpush1.bf16.msra.mxu0 %v86
  %115 = vmatprep.subr.bf16.mxu0 0
  %116 = vmatpush1.bf16.msra.mxu0 %v85
  %117 = vmatprep.subr.bf16.mxu0 0
  %118 = vmatpush2.bf16.msra.mxu0 0
  %119 = vmatprep.subr.bf16.mxu0 0
  %120 = vmatpush2.bf16.msra.mxu0 0
  %121 = vmatprep.subr.bf16.mxu0 0
  %122 = vmatpush2.bf16.msra.mxu0 0
  %123 = vmatprep.subr.bf16.mxu0 0
  %124 = vmatpush2.bf16.msra.mxu0 0
  %125 = vmatprep.subr.bf16.mxu0 0
  %126 = vmatpush2.bf16.msra.mxu0 0
  %127 = vmatprep.subr.bf16.mxu0 0
  %128 = vmatpush2.bf16.msra.mxu0 0
  %129 = vmatprep.subr.bf16.mxu0 0
  %130 = vmatpush2.bf16.msra.mxu0 0
  %131 = vmatprep.subr.bf16.mxu0 0
  %132 = vmatpush2.bf16.msra.mxu0 0
  %133 = vmatprep.mubr.bf16.mxu0 0
  %134 = vmatmul.mubr.bf16.gmra.mxu0 %v29
  %v135 = vpop.f32.mrf.mxu0
  %v136 = vadd.f32 %v51, %v135
  %v137 = vpop.f32.mrf.mxu0
  %v138 = vpop.f32.mrf.mxu0
  %v139 = vpop.f32.mrf.mxu0
  %140 = vdwg.mxu0
  %v141 = vmax.f32 %v136, 0.0
  %v142 = vld [vmem:[%s3] sm:$0xf]
  %v143 = vld [vmem:[%s3 + $0x4] sm:$0xf]
  %v144 = vld [vmem:[%s3 + $0x8] sm:$0xf]
  %v145 = vld [vmem:[%s3 + $0xc] sm:$0xf]
  %v146 = vld [vmem:[%s3 + $0x10] sm:$0xf]
  %v147 = vld [vmem:[%s3 + $0x14] sm:$0xf]
  %v148 = vld [vmem:[%s3 + $0x18] sm:$0xf]
  %v149 = vld [vmem:[%s3 + $0x1c] sm:$0xf]
  %v150 = vld [vmem:[%s3 + $0x20] sm:$0xf]
  %v151 = vld [vmem:[%s3 + $0x24] sm:$0xf]
  %v152 = vld [vmem:[%s3 + $0x28] sm:$0xf]
  %v153 = vld [vmem:[%s3 + $0x2c] sm:$0xf]
  %v154 = vld [vmem:[%s3 + $0x30] sm:$0xf]
  %v155 = vld [vmem:[%s3 + $0x34] sm:$0xf]
  %v156 = vld [vmem:[%s3 + $0x38] sm:$0xf]
  %v157 = vld [vmem:[%s3 + $0x3c] sm:$0xf]
  %v158 = vld [vmem:[%s4] sm:$0x1]
  %v159 = vpack.c.bf16 %v141, %v141
  %v161 = vlaneseq
  %v162 = vshrl.u32 %v161, 7
  %v163 = vsub.s32 0, %v162
  %v164 = vrot.slane %v158, %v163
  %v182 = vunpack.c.l.b16 %v142
  %v183 = vunpack.c.l.b16 %v143
  %v184 = vunpack.c.l.b16 %v144
  %v185 = vunpack.c.l.b16 %v145
  %v186 = vunpack.c.l.b16 %v146
  %v187 = vunpack.c.l.b16 %v147
  %v188 = vunpack.c.l.b16 %v148
  %v189 = vunpack.c.l.b16 %v149
  %v190 = vunpack.c.l.b16 %v150
  %v191 = vunpack.c.l.b16 %v151
  %v192 = vunpack.c.l.b16 %v152
  %v193 = vunpack.c.l.b16 %v153
  %v194 = vunpack.c.l.b16 %v154
  %v195 = vunpack.c.l.b16 %v155
  %v196 = vunpack.c.l.b16 %v156
  %v197 = vunpack.c.l.b16 %v157
  %v198 = vpack.c.b16 %v183, %v182
  %v199 = vpack.c.b16 %v185, %v184
  %v200 = vpack.c.b16 %v187, %v186
  %v201 = vpack.c.b16 %v189, %v188
  %v202 = vpack.c.b16 %v191, %v190
  %v203 = vpack.c.b16 %v193, %v192
  %v204 = vpack.c.b16 %v195, %v194
  %v205 = vpack.c.b16 %v197, %v196
  %214 = vmatprep.subr.bf16.mxu0 0
  %215 = vmatpush1.bf16.msra.mxu0 %v205
  %216 = vmatprep.subr.bf16.mxu0 0
  %217 = vmatpush1.bf16.msra.mxu0 %v204
  %218 = vmatprep.subr.bf16.mxu0 0
  %219 = vmatpush1.bf16.msra.mxu0 %v203
  %220 = vmatprep.subr.bf16.mxu0 0
  %221 = vmatpush1.bf16.msra.mxu0 %v202
  %222 = vmatprep.subr.bf16.mxu0 0
  %223 = vmatpush1.bf16.msra.mxu0 %v201
  %224 = vmatprep.subr.bf16.mxu0 0
  %225 = vmatpush1.bf16.msra.mxu0 %v200
  %226 = vmatprep.subr.bf16.mxu0 0
  %227 = vmatpush1.bf16.msra.mxu0 %v199
  %228 = vmatprep.subr.bf16.mxu0 0
  %229 = vmatpush1.bf16.msra.mxu0 %v198
  %230 = vmatprep.subr.bf16.mxu0 0
  %231 = vmatpush2.bf16.msra.mxu0 0
  %232 = vmatprep.subr.bf16.mxu0 0
  %233 = vmatpush2.bf16.msra.mxu0 0
  %234 = vmatprep.subr.bf16.mxu0 0
  %235 = vmatpush2.bf16.msra.mxu0 0
  %236 = vmatprep.subr.bf16.mxu0 0
  %237 = vmatpush2.bf16.msra.mxu0 0
  %238 = vmatprep.subr.bf16.mxu0 0
  %239 = vmatpush2.bf16.msra.mxu0 0
  %240 = vmatprep.subr.bf16.mxu0 0
  %241 = vmatpush2.bf16.msra.mxu0 0
  %242 = vmatprep.subr.bf16.mxu0 0
  %243 = vmatpush2.bf16.msra.mxu0 0
  %244 = vmatprep.subr.bf16.mxu0 0
  %245 = vmatpush2.bf16.msra.mxu0 0
  %246 = vmatprep.mubr.bf16.mxu0 0
  %247 = vmatmul.mubr.bf16.gmra.mxu0 %v159
  %v248 = vpop.f32.mrf.mxu0
  %v249 = vadd.f32 %v164, %v248
  %v250 = vpop.f32.mrf.mxu0
  %v251 = vpop.f32.mrf.mxu0
  %v252 = vpop.f32.mrf.mxu0
  %253 = vdwg.mxu0
  %v254 = vmax.f32 %v249, 0.0
  %v255 = vld [vmem:[%s5] sm:$0x1]
  %v256 = vld [vmem:[#allocation2] sm:$0x1]
  %v258 = vlaneseq
  %v259 = vshrl.u32 %v258, 7
  %v260 = vsub.s32 0, %v259
  %v261 = vrot.slane %v255, %v260
  %v263 = vmul.f32 %v254, %v261
  %264 = vadd.xlane.f32.xlu0 %v263
  %v265 = vpop.xlane.xlu0 %264
  %v267 = vlaneseq
  %v268 = vshrl.u32 %v267, 7
  %v269 = vsub.s32 0, %v268
  %v270 = vrot.slane %v256, %v269
  %v272 = vadd.f32 %v265, %v270
  %vm273 = vcmask 7168
  %274 = vst.msk [vmem:[%s7] sm:$0xff] %vm273, %v272
  // Predicated region
  $region30: #{mlp_forward.1} parent=0 // pred_check
    _
  $region31: #{mlp_forward.1} parent=0 // pred_check_branch
    %276 = sbr.rel (0) target = $region33
  $region32: #{mlp_forward.1} parent=0 // pred_region
    _
  $region33: #{mlp_forward.1} parent=0 // pred_fallthru
    _
  // Predicated region
  $region34: #{mlp_forward.1} parent=0 // pred_check
    _
  $region35: #{mlp_forward.1} parent=0 // pred_check_branch
    %278 = sbr.rel (0) target = $region37
  $region36: #{mlp_forward.1} parent=0 // pred_region
    _
  $region37: #{mlp_forward.1} parent=0 // pred_fallthru
    _

</llo_original>
